<compile_context>
chip_gen: v5e
topology: v5e:2x2
jax: 0.10.0
libtpu: 0.0.40
codegen_flags: <defaults>
</compile_context>

<pallas_src>
import jax
import jax.numpy as jnp
from jax.experimental import pallas as pl
from jax.experimental.pallas import tpu as pltpu

LANE = 128
TARGET_ROWS = 4096                    # rows of 128 lanes per input block
TARGET_ELEMS = TARGET_ROWS * LANE     # ~2 MiB f32 input block, 4 MiB output
VMEM_LIMIT_BYTES = 48 << 20           # safe on v5e/v6e (128 MiB) and v7x (64 MiB)


def _sublane(dtype):
    # Sublane packing: 8 for 4-byte, 16 for 2-byte, 32 for 1-byte dtypes.
    return max(8, 32 // jnp.dtype(dtype).itemsize)


def crelu_kernel(x_ref, o_ref):
    # x_ref: (bn, R, L) tile;  o_ref: (bn, 2, R, L) tile, axis 1 = [relu(x), relu(-x)].
    # Two direct stores; Mosaic streams per-vreg (vld, vmax, vst).
    x = x_ref[...]
    o_ref[:, 0, :, :] = jnp.maximum(x, 0)
    o_ref[:, 1, :, :] = jnp.maximum(-x, 0)


def _choose_tiling(N, R, L, sub):
    """Pick (samples-per-block bn, rows-per-block r_tile) for an (N, R, L) view."""
    r_target = max(sub, ((TARGET_ELEMS // max(L, 1)) // sub) * sub)
    if R > r_target:
        bn, r_tile = 1, r_target                       # sublane-aligned tile; masked edge block
    else:
        # Small per-sample slab: batch samples into one block to amortize the
        # ~0.35 us per-grid-step cost and issue large contiguous DMAs.
        bn = max(1, min(N, TARGET_ELEMS // max(R * L, 1)))
        r_tile = R                                     # full dim -> no alignment constraint
    # Keep >= 2 grid steps on a parallel axis so both v7x TensorCores get work.
    if pl.cdiv(N, bn) * pl.cdiv(R, r_tile) < 2:
        if N >= 2:
            bn = pl.cdiv(N, 2)
        elif R >= 2 * sub:
            r_tile = pl.cdiv(pl.cdiv(R, 2), sub) * sub
    return bn, r_tile


def _run(xr, bn, r_tile):
    """xr: (N, R, L).  Returns (N, 2, R, L) holding [relu(x), relu(-x)]."""
    N, R, L = xr.shape
    itemsize = jnp.dtype(xr.dtype).itemsize
    grid = (pl.cdiv(N, bn), pl.cdiv(R, r_tile))
    return pl.pallas_call(
        crelu_kernel,
        out_shape=jax.ShapeDtypeStruct((N, 2, R, L), xr.dtype),
        grid_spec=pl.GridSpec(
            grid=grid,
            in_specs=[pl.BlockSpec((bn, r_tile, L), lambda n, r: (n, r, 0))],
            out_specs=pl.BlockSpec((bn, 2, r_tile, L), lambda n, r: (n, 0, r, 0)),
        ),
        compiler_params=pltpu.CompilerParams(
            dimension_semantics=("parallel", "parallel"),
            vmem_limit_bytes=VMEM_LIMIT_BYTES,
        ),
        cost_estimate=pl.CostEstimate(
            flops=2 * N * R * L,
            transcendentals=0,
            bytes_accessed=3 * N * R * L * itemsize,
        ),
    )(xr)


def _crelu_padded(x):
    # Rare fallback (huge non-128-multiple H*W): pad the flattened sample to a
    # lane multiple, run the lane-dense path, slice.  Costs extra HBM passes
    # but handles any shape correctly.
    N, C, H, W = x.shape
    total = C * H * W
    rows = pl.cdiv(total, LANE)
    xf = jnp.pad(x.reshape(N, total), ((0, 0), (0, rows * LANE - total)))
    bn, r_tile = _choose_tiling(N, rows, LANE, _sublane(x.dtype))
    out = _run(xf.reshape(N, rows, LANE), bn, r_tile)
    out = out.reshape(N, 2, rows * LANE)[:, :, :total]
    return out.reshape(N, 2 * C, H, W)


def crelu(x):
    """CReLU on NCHW input: returns (N, 2C, H, W) = cat([relu(x), relu(-x)], 1)."""
    N, C, H, W = x.shape
    HW = H * W
    total = C * HW
    sub = _sublane(x.dtype)
    itemsize = jnp.dtype(x.dtype).itemsize

    if total % LANE == 0:
        # Lane-dense path: flatten each sample into (rows, 128).  Free reshapes
        # in and out, full unmasked tiles, zero padding traffic.
        rows = total // LANE
        bn, r_tile = _choose_tiling(N, rows, LANE, sub)
        out = _run(x.reshape(N, rows, LANE), bn, r_tile)
        return out.reshape(N, 2 * C, H, W)

    if min(C, sub) * HW * itemsize <= (4 << 20):
        # Unaligned H*W: run on the free (N, C, H*W) view.  Masked lane stores,
        # but no extra HBM passes from a wrapper pad/slice.
        bn, c_tile = _choose_tiling(N, C, HW, sub)
        out = _run(x.reshape(N, C, HW), bn, c_tile)
        return out.reshape(N, 2 * C, H, W)

    # TODO(synk): pathological (very large, non-128-multiple H*W) shapes fall
    # back to a pad + slice around the lane-dense path.
    return _crelu_padded(x)


def _reference(x):
    return jnp.concatenate([jnp.maximum(x, 0), jnp.maximum(-x, 0)], axis=1)


if __name__ == "__main__":
    key = jax.random.PRNGKey(0)
    k0, k1, k2 = jax.random.split(key, 3)

    # Primary NCHW input consistent with the module's forward.
    x = jax.random.normal(k0, (2, 4, 16, 16), dtype=jnp.float32)
    out = jax.block_until_ready(crelu(x))
    assert out.shape == (2, 8, 16, 16), out.shape
    assert out.dtype == x.dtype
    assert jnp.allclose(out, _reference(x)), "mismatch vs reference (aligned case)"

    # C*H*W not a multiple of 128: exercises the masked-lane (N, C, H*W) path.
    x2 = jax.random.normal(k1, (1, 3, 10, 10), dtype=jnp.float32)
    out2 = jax.block_until_ready(crelu(x2))
    assert out2.shape == (1, 6, 10, 10), out2.shape
    assert jnp.allclose(out2, _reference(x2)), "mismatch vs reference (unaligned case)"

    # bf16 + batch 1: exercises sublane packing of 16 and the >=2-grid-step split.
    x3 = jax.random.normal(k2, (1, 4, 32, 32), dtype=jnp.bfloat16)
    out3 = jax.block_until_ready(crelu(x3))
    assert out3.shape == (1, 8, 32, 32), out3.shape
    assert out3.dtype == jnp.bfloat16
    assert jnp.allclose(out3, _reference(x3)), "mismatch vs reference (bf16 case)"

    print("KERNEL_OK")
</pallas_src>

<mosaic_0001>
module attributes {stable_mosaic.version = 11 : i64} {
  func.func @crelu_kernel(%arg0: i32, %arg1: i32, %arg2: memref<1x8x128xf32, #tpu.memory_space<vmem>>, %arg3: memref<1x2x8x128xf32, #tpu.memory_space<vmem>>) attributes {dimension_semantics = [#tpu.dimension_semantics<parallel>, #tpu.dimension_semantics<parallel>], iteration_bounds = array<i64: 2, 1>, scalar_prefetch = 0 : i64, scratch_operands = 0 : i64, tpu.core_type = #tpu.core_type<tc>, window_params = [{transform_indices = @transform_0, window_bounds = array<i64: 1, 8, 128>}, {transform_indices = @transform_1, window_bounds = array<i64: 1, 2, 8, 128>}]} {
    %c0 = arith.constant 0 : index
    %c0_0 = arith.constant 0 : index
    %c0_1 = arith.constant 0 : index
    %0 = vector.load %arg2[%c0, %c0_0, %c0_1] : memref<1x8x128xf32, #tpu.memory_space<vmem>>, vector<1x8x128xf32>
    %cst = arith.constant 0.000000e+00 : f32
    %1 = vector.broadcast %cst : f32 to vector<1x8x128xf32>
    %2 = arith.maximumf %0, %1 : vector<1x8x128xf32>
    %c0_2 = arith.constant 0 : index
    %c0_3 = arith.constant 0 : index
    %c0_4 = arith.constant 0 : index
    %c0_5 = arith.constant 0 : index
    %3 = vector.load %arg3[%c0_2, %c0_3, %c0_4, %c0_5] : memref<1x2x8x128xf32, #tpu.memory_space<vmem>>, vector<1x1x8x128xf32>
    %4 = vector.shape_cast %3 : vector<1x1x8x128xf32> to vector<1x8x128xf32>
    %5 = vector.shape_cast %2 : vector<1x8x128xf32> to vector<1x1x8x128xf32>
    tpu.vector_store %arg3[%c0_2, %c0_3, %c0_4, %c0_5], %5 {strides = array<i32>} : memref<1x2x8x128xf32, #tpu.memory_space<vmem>>, vector<1x1x8x128xf32>,
    %cst_6 = arith.constant 0.000000e+00 : f32
    %6 = vector.broadcast %cst_6 : f32 to vector<1x8x128xf32>
    %7 = arith.subf %6, %0 : vector<1x8x128xf32>
    %cst_7 = arith.constant 0.000000e+00 : f32
    %8 = vector.broadcast %cst_7 : f32 to vector<1x8x128xf32>
    %9 = arith.maximumf %7, %8 : vector<1x8x128xf32>
    %c0_8 = arith.constant 0 : index
    %c1 = arith.constant 1 : index
    %c0_9 = arith.constant 0 : index
    %c0_10 = arith.constant 0 : index
    %10 = vector.load %arg3[%c0_8, %c1, %c0_9, %c0_10] : memref<1x2x8x128xf32, #tpu.memory_space<vmem>>, vector<1x1x8x128xf32>
    %11 = vector.shape_cast %10 : vector<1x1x8x128xf32> to vector<1x8x128xf32>
    %12 = vector.shape_cast %9 : vector<1x8x128xf32> to vector<1x1x8x128xf32>
    tpu.vector_store %arg3[%c0_8, %c1, %c0_9, %c0_10], %12 {strides = array<i32>} : memref<1x2x8x128xf32, #tpu.memory_space<vmem>>, vector<1x1x8x128xf32>,
    return
  }
  func.func @transform_0(%arg0: i32, %arg1: i32) -> (i32, i32, i32) {
    %c0_i32 = arith.constant 0 : i32
    %c0_i32_0 = arith.constant 0 : i32
    return %arg0, %arg1, %c0_i32 : i32, i32, i32
  }
  func.func @transform_1(%arg0: i32, %arg1: i32) -> (i32, i32, i32, i32) {
    %c0_i32 = arith.constant 0 : i32
    %c0_i32_0 = arith.constant 0 : i32
    %c0_i32_1 = arith.constant 0 : i32
    return %arg0, %c0_i32, %arg1, %c0_i32_0 : i32, i32, i32, i32
  }
}

</mosaic_0001>

<llo_original>
// kernel: tpu_custom_call.1
$region0: #{tpu_custom_call.1}
  #allocation0 [shape = 'u32[]', space=smem, size = 0x4, offset = 0x4, fixed_abs, tag = 'smem constant byte address 0x4 - core index']
  #allocation1 [shape = 'u32[72,128]{1,0:T(1,128)}', space=vmem, size = 0x9000, scoped, tag = 'internal scratch']
  %s0 = inlined_call_operand.hbm [shape: f32[2,8,128], index: 0, kind: input, shape index: {}]
  %s1 = inlined_call_operand.hbm [shape: f32[2,2,8,128], index: 1, kind: output, shape index: {}]
  %s2 = sld [smem:[#allocation0]]
  $region41: #{tpu_custom_call.1} parent=0
    _
  %s4 = ssub.s32 1, %s2
  %s5 = scalar_select 0, %s4, %s2
  $region1: #{tpu_custom_call.1} parent=0
    #allocation2 [shape = 'u8[8192]{0}', space=vmem, size = 0x2000, scoped, tag = 'input window, operand 0']
    #allocation3 [shape = 's32[2]{0}', space=sflag, size = 0x8, scoped, tag = 'scoped memory for tpu_custom_call.1']
    #allocation4 [shape = 's32[2]{0}', space=sflag, size = 0x8, scoped, tag = 'scoped memory for tpu_custom_call.1']
    #allocation5 [shape = 'u8[16384]{0}', space=vmem, size = 0x4000, scoped, tag = 'output window, operand 0']
    %6 = vsyncpa [#allocation3], 0
    %s7 = scalar_lea.sflag [#allocation3], 1
    %8 = vsyncpa %s7, 0
    %9 = vsyncpa [#allocation4], 0
    %s10 = scalar_lea.sflag [#allocation4], 1
    %11 = vsyncpa %s10, 0
    loop: start=0, step=1, limit=4
    $region2: #{tpu_custom_call.1} parent=1 // loop_pre_header
      _
    $region3: #{tpu_custom_call.1} parent=1 // loop_header
      %s13 = sphi 0, %s17
      %p14 = scmp.ge.s32.totalorder %s13, 4
      %s20 = sphi 0, %s32
      %s21 = sphi 0, %s28
      %s22 = sphi 0, %s20
      %s23 = sphi 0, %s21
      %s24 = sphi 0, %s22
      %s25 = sphi 0, %s23
      %s37 = sphi 0, %s39
      %s40 = sphi 0, %s37
      %s41 = sphi 0, %s40
      %s57 = sphi 0, %s41
      %s65 = sphi 0, %s67
      %s68 = sphi 0, %s65
      %s69 = sphi 0, %s68
      %s85 = sphi 0, %s69
    $region4: #{tpu_custom_call.1} parent=1 // loop_header_branch
      %16 = sbr.rel (%p14) target = $region8
    $region5: #{tpu_custom_call.1} parent=1 // loop_body
      %s18 = ssub.s32 %s13, 1
      %s19 = ssub.s32 %s13, 2
      %s26 = sadd.s32 1, %s21
      %p27 = scmp.ge.s32.totalorder %s26, 1
      %s28 = scalar_select %p27, 0, %s26
      %s29 = sadd.s32 1, %s20
      %s30 = scalar_select %p27, %s29, %s20
      %p31 = scmp.ge.s32.totalorder %s30, 2
      %s32 = scalar_select %p31, 0, %s30
      %s33 = ssub.s32 %s20, %s32
      %s34 = ssub.s32 %s21, %s28
      %s35 = sor.u32 %s33, %s34
      %p36 = scmp.eq.s32.totalorder %s35, 0
      %s38 = sadd.s32 %s37, 1
      %s39 = scalar_select %p36, %s37, %s38
      %p42 = pneg %p36
      %p43 = scmp.eq.s32.totalorder %s13, 1
      %p44 = por %p42, %p43
      %p45 = scmp.ne.s32.totalorder %s37, %s40
      %p46 = scmp.eq.s32.totalorder %s13, 0
      %p47 = por %p45, %p46
      %p48 = scmp.ne.s32.totalorder %s37, %s40
      %p49 = scmp.eq.s32.totalorder %s18, 1
      %p50 = por %p48, %p49
      %p51 = scmp.ne.s32.totalorder %s40, %s41
      %p52 = scmp.eq.s32.totalorder %s18, 0
      %p53 = por %p51, %p52
      %p54 = scmp.ne.s32.totalorder %s40, %s41
      %p55 = scmp.eq.s32.totalorder %s19, 1
      %p56 = por %p54, %p55
      %p58 = scmp.ne.s32.totalorder %s41, %s57
      %p59 = scmp.eq.s32.totalorder %s19, 0
      %p60 = por %p58, %p59
      %s61 = ssub.s32 %s20, %s32
      %s62 = ssub.s32 %s21, %s28
      %s63 = sor.u32 %s61, %s62
      %p64 = scmp.eq.s32.totalorder %s63, 0
      %s66 = sadd.s32 %s65, 1
      %s67 = scalar_select %p64, %s65, %s66
      %p70 = pneg %p64
      %p71 = scmp.eq.s32.totalorder %s13, 1
      %p72 = por %p70, %p71
      %p73 = scmp.ne.s32.totalorder %s65, %s68
      %p74 = scmp.eq.s32.totalorder %s13, 0
      %p75 = por %p73, %p74
      %p76 = scmp.ne.s32.totalorder %s65, %s68
      %p77 = scmp.eq.s32.totalorder %s18, 1
      %p78 = por %p76, %p77
      %p79 = scmp.ne.s32.totalorder %s68, %s69
      %p80 = scmp.eq.s32.totalorder %s18, 0
      %p81 = por %p79, %p80
      %p82 = scmp.ne.s32.totalorder %s68, %s69
      %p83 = scmp.eq.s32.totalorder %s19, 1
      %p84 = por %p82, %p83
      %p86 = scmp.ne.s32.totalorder %s69, %s85
      %p87 = scmp.eq.s32.totalorder %s19, 0
      %p88 = por %p86, %p87
      %p89 = scmp.le.s32.totalorder 1, %s13
      %p90 = scmp.lt.s32.totalorder %s13, 3
      %p91 = pnand %p89, %p90
      %p92 = pneg %p91
      // Predicated region
      $region9: #{tpu_custom_call.1} parent=5 // pred_check
        _
      $region10: #{tpu_custom_call.1} parent=5 // pred_check_branch
        %94 = sbr.rel (%p91) target = $region12
      $region11: #{tpu_custom_call.1} parent=5 // pred_region
        %s95 = ssub.s32 %s13, 1
      $region12: #{tpu_custom_call.1} parent=5 // pred_fallthru
        _
      %p96 = scmp.lt.s32.totalorder %s13, 2
      // Predicated region
      $region13: #{tpu_custom_call.1} parent=5 // pred_check
        %p97 = pneg %p96
      $region14: #{tpu_custom_call.1} parent=5 // pred_check_branch
        %99 = sbr.rel (%p97) target = $region16
      $region15: #{tpu_custom_call.1} parent=5 // pred_region
        // Predicated region
        $region17: #{tpu_custom_call.1} parent=15 // pred_check
          %p100 = pneg %p47
        $region18: #{tpu_custom_call.1} parent=15 // pred_check_branch
          %102 = sbr.rel (%p100) target = $region20
        $region19: #{tpu_custom_call.1} parent=15 // pred_region
          %s103 = sand.u32 %s37, 1
          %s104 = scalar_lea.sflag [#allocation3], %s103
          %s105 = sand.u32 %s37, 1
          %s106 = smul.addr %s105, 8
          %s107 = scalar_lea.vmem [#allocation2], %s106
          %109 = vsyncadd %s104, 0
          %s110 = sadd.s32 %s21, %s20
          %s111 = smul.addr %s110, 8
          %s112 = scalar_lea.hbm %s0, %s111
          %s114 = sshll.u32 %s112, 4
          %s115 = int_to_ptr.hbm [resolvable:$true] %s114
          %s116 = sshll.u32 %s107, 4
          %s117 = int_to_ptr.vmem [resolvable:$true] %s116
          %119 = dma.hbm_to_vmem [thread:$0]  %s115, 128, %s117, %s104
        $region20: #{tpu_custom_call.1} parent=15 // pred_fallthru
          _
      $region16: #{tpu_custom_call.1} parent=5 // pred_fallthru
        _
      %p120 = scmp.le.s32.totalorder 1, %s13
      %p121 = scmp.lt.s32.totalorder %s13, 3
      %p122 = pnand %p120, %p121
      %p123 = pneg %p122
      // Predicated region
      $region21: #{tpu_custom_call.1} parent=5 // pred_check
        _
      $region22: #{tpu_custom_call.1} parent=5 // pred_check_branch
        %125 = sbr.rel (%p122) target = $region24
      $region23: #{tpu_custom_call.1} parent=5 // pred_region
        %s126 = ssub.s32 %s13, 1
        %s127 = sand.u32 %s40, 1
        %s128 = scalar_lea.sflag [#allocation3], %s127
        %s129 = sand.u32 %s40, 1
        %s130 = smul.addr %s129, 8
        %s131 = scalar_lea.vmem [#allocation2], %s130
        // Predicated region
        $region25: #{tpu_custom_call.1} parent=23 // pred_check
          %p132 = pneg %p53
        $region26: #{tpu_custom_call.1} parent=23 // pred_check_branch
          %134 = sbr.rel (%p132) target = $region28
        $region27: #{tpu_custom_call.1} parent=23 // pred_region
          %136 = dma.done %s128, 128
        $region28: #{tpu_custom_call.1} parent=23 // pred_fallthru
          _
        %s137 = sand.u32 %s40, 1
        %s138 = scalar_lea.sflag [#allocation3], %s137
        %s139 = sand.u32 %s40, 1
        %s140 = smul.addr %s139, 8
        %s141 = scalar_lea.vmem [#allocation2], %s140
        %p142 = pneg %p53
        %p143 = pneg %p50
        %p144 = pneg %p81
        %p145 = pneg %p78
        %s146 = sand.u32 %s68, 1
        %s147 = scalar_lea.sflag [#allocation4], %s146
        %s148 = sand.u32 %s68, 1
        %s149 = smul.addr %s148, 16
        %s150 = scalar_lea.vmem [#allocation5], %s149
        %v151 = vld [vmem:[%s131] sm:$0xff]
        %v152 = vmax.f32 %v151, 0.0
        %153 = vst [vmem:[%s150] sm:$0xff] %v152
        %v154 = vsub.f32 0.0, %v151
        %v155 = vmax.f32 %v154, 0.0
        %s156 = scalar_lea.vmem %s150, 8 [#allocation5]
        %157 = vst [vmem:[%s156] sm:$0xff] %v155
        %s158 = sand.u32 %s68, 1
        %s159 = scalar_lea.sflag [#allocation4], %s158
        %s160 = sand.u32 %s68, 1
        %s161 = smul.addr %s160, 16
        %s162 = scalar_lea.vmem [#allocation5], %s161
        // Predicated region
        $region29: #{tpu_custom_call.1} parent=23 // pred_check
          %p163 = pneg %p78
        $region30: #{tpu_custom_call.1} parent=23 // pred_check_branch
          %165 = sbr.rel (%p163) target = $region32
        $region31: #{tpu_custom_call.1} parent=23 // pred_region
          %167 = vsyncadd %s159, 0
          %s168 = smul.addr %s22, 2
          %s169 = sadd.s32 %s23, %s168
          %s170 = smul.addr %s169, 8
          %s171 = scalar_lea.hbm %s1, %s170
          %s172 = sshll.u32 %s162, 4
          %s173 = int_to_ptr.vmem [resolvable:$true] %s172
          %s174 = sshll.u32 %s171, 4
          %s175 = int_to_ptr.hbm [resolvable:$true] %s174
          %180 = dma.vmem_to_hbm [thread:$0]  %s173, 256, %s175, %s159, 128, 128, 8
        $region32: #{tpu_custom_call.1} parent=23 // pred_fallthru
          _
      $region24: #{tpu_custom_call.1} parent=5 // pred_fallthru
        _
      %p181 = scmp.le.s32.totalorder 2, %s13
      // Predicated region
      $region33: #{tpu_custom_call.1} parent=5 // pred_check
        %p182 = pneg %p181
      $region34: #{tpu_custom_call.1} parent=5 // pred_check_branch
        %184 = sbr.rel (%p182) target = $region36
      $region35: #{tpu_custom_call.1} parent=5 // pred_region
        %s185 = ssub.s32 %s13, 2
        // Predicated region
        $region37: #{tpu_custom_call.1} parent=35 // pred_check
          %p186 = pneg %p84
        $region38: #{tpu_custom_call.1} parent=35 // pred_check_branch
          %188 = sbr.rel (%p186) target = $region40
        $region39: #{tpu_custom_call.1} parent=35 // pred_region
          %s189 = sand.u32 %s69, 1
          %s190 = scalar_lea.sflag [#allocation4], %s189
          %s191 = sand.u32 %s69, 1
          %s192 = smul.addr %s191, 16
          %s193 = scalar_lea.vmem [#allocation5], %s192
          %195 = dma.done %s190, 256
        $region40: #{tpu_custom_call.1} parent=35 // pred_fallthru
          _
      $region36: #{tpu_custom_call.1} parent=5 // pred_fallthru
        _
    $region6: #{tpu_custom_call.1} parent=1 // loop_footer
      %s17 = sadd.s32 1, %s13
    $region7: #{tpu_custom_call.1} parent=1 // loop_footer_branch
      %12 = sbr.rel target = $region3
    $region8: #{tpu_custom_call.1} parent=1 // loop_exit
      _
    %196 = vsyncpa [#allocation3], 1
    %s197 = scalar_lea.sflag [#allocation3], 1
    %198 = vsyncpa %s197, 1
    %199 = vsyncpa [#allocation4], 1
    %s200 = scalar_lea.sflag [#allocation4], 1
    %201 = vsyncpa %s200, 1

</llo_original>
